<compile_context>
chip_gen: v5e
topology: v5e:2x2
jax: 0.10.0
libtpu: 0.0.40
codegen_flags: <defaults>
</compile_context>

<pallas_src>
import functools

import jax
import jax.numpy as jnp
from jax import lax
from jax.experimental import pallas as pl
from jax.experimental.pallas import tpu as pltpu


def _round_up(a: int, b: int) -> int:
    return ((a + b - 1) // b) * b


def _ensemble_loss_kernel(x_ref, y_ref, w_ref, sw_ref, o_ref, acc_ref, *, n_true: int):
    # acc_ref: (1, 1) f32 scratch, resident across the whole (reduction) grid axis.
    @pl.when(pl.program_id(0) == 0)
    def _():
        acc_ref[...] = jnp.zeros_like(acc_ref)

    x = x_ref[...].astype(jnp.float32)   # (BN, C) logits, cast to f32 in-register
    y = y_ref[...]                       # (BN, 1) int32 labels
    w = w_ref[...]                       # (1,  C) f32 class (label) weights
    sw = sw_ref[...]                     # (BN, 1) f32 sample weights (0 on padded rows)
    bn, c = x.shape

    # numerically stable log-sum-exp over classes (lane axis)
    m = jnp.max(x, axis=-1, keepdims=True)                               # (BN, 1)
    lse = m + jnp.log(jnp.sum(jnp.exp(x - m), axis=-1, keepdims=True))   # (BN, 1)

    # one-hot select of the label column (VPU-friendly, no gather)
    cls = lax.broadcasted_iota(jnp.int32, (bn, c), 1)                    # (BN, C)
    onehot = (cls == y).astype(jnp.float32)                              # (BN, C)

    # fused lane-dense reduction:
    #   sum_ij onehot_ij * sw_i * w_j * (lse_i - x_ij)
    # == sum_i sw_i * label_weights[y_i] * (lse_i - x_{i, y_i})
    contrib = onehot * (sw * w) * (lse - x)                              # (BN, C)
    acc_ref[...] = acc_ref[...] + jnp.sum(contrib, keepdims=True)        # (1, 1)

    @pl.when(pl.program_id(0) == pl.num_programs(0) - 1)
    def _():
        o_ref[...] = acc_ref[...] / jnp.float32(n_true)


def ensemble_loss(x, y, label_weights, sample_weights, *, block_rows=None,
                  vmem_limit_bytes=None):
    """x: [N, C] logits (any float dtype), y: [N] int labels,
    label_weights: [C], sample_weights: [1] or [N].  Returns scalar mean loss."""
    n, c = x.shape
    x_itemsize = jnp.dtype(x.dtype).itemsize

    y1 = jnp.asarray(y).reshape(n).astype(jnp.int32)
    w2 = jnp.asarray(label_weights).reshape(1, c).astype(jnp.float32)
    # torch: self.sample_weights.expand(y.size()) when sizes differ
    sw1 = jnp.broadcast_to(
        jnp.asarray(sample_weights, jnp.float32).reshape(-1), (n,)).astype(jnp.float32)

    # --- choose batch tile size (multiple of 8, ~2 MiB of logits per tile) ---
    if block_rows is None:
        target_bytes = 2 << 20
        bn = max(8, (target_bytes // max(1, c * x_itemsize)) // 8 * 8)
        bn = min(bn, 2048)
        bn = min(bn, _round_up(n, 8))
    else:
        bn = max(8, _round_up(block_rows, 8))
        bn = min(bn, _round_up(n, 8))

    # --- pad batch to a multiple of bn; padded rows get sample_weight = 0 ---
    n_pad = _round_up(n, bn)
    if n_pad != n:
        pad = n_pad - n
        x_p = jnp.pad(x, ((0, pad), (0, 0)))
        y_p = jnp.pad(y1, (0, pad))
        sw_p = jnp.pad(sw1, (0, pad))      # zeros -> padded rows contribute exactly 0
    else:
        x_p, y_p, sw_p = x, y1, sw1
    y2 = y_p.reshape(n_pad, 1)
    sw2 = sw_p.reshape(n_pad, 1)

    grid = (n_pad // bn,)

    # --- explicit VMEM budget (v5e default scoped limit is only 16 MiB) ---
    if vmem_limit_bytes is None:
        tile_bytes = bn * c * x_itemsize + 2 * bn * 4 + c * 4 + 4
        vmem_limit_bytes = min(max(4 * tile_bytes + (1 << 20), 8 << 20), 48 << 20)

    kernel = functools.partial(_ensemble_loss_kernel, n_true=n)

    # TODO(synk): if this loss is evaluated for many ensemble members, batch them into
    # one pallas_call with an extra leading "parallel" grid axis instead of per-member calls.
    out = pl.pallas_call(
        kernel,
        out_shape=jax.ShapeDtypeStruct((1, 1), jnp.float32),
        grid_spec=pltpu.PrefetchScalarGridSpec(
            num_scalar_prefetch=0,
            grid=grid,
            in_specs=[
                pl.BlockSpec((bn, c), lambda i: (i, 0)),   # x tile   (pipelined)
                pl.BlockSpec((bn, 1), lambda i: (i, 0)),   # y tile
                pl.BlockSpec((1, c), lambda i: (0, 0)),    # label weights (resident)
                pl.BlockSpec((bn, 1), lambda i: (i, 0)),   # sample weights tile
            ],
            out_specs=pl.BlockSpec((1, 1), lambda i: (0, 0)),
            scratch_shapes=[pltpu.VMEM((1, 1), jnp.float32)],
        ),
        compiler_params=pltpu.CompilerParams(
            dimension_semantics=("arbitrary",),            # reduction into one output
            vmem_limit_bytes=int(vmem_limit_bytes),
        ),
    )(x_p, y2, w2, sw2)
    return out[0, 0]


def _reference(x, y, label_weights, sample_weights):
    n = x.shape[0]
    xf = x.astype(jnp.float32)
    logp = jax.nn.log_softmax(xf, axis=-1)
    per_sample = -label_weights[y] * logp[jnp.arange(n), y]
    sw = jnp.broadcast_to(
        jnp.asarray(sample_weights, jnp.float32).reshape(-1), (n,))
    return jnp.mean(sw * per_sample)


if __name__ == "__main__":
    key = jax.random.PRNGKey(0)

    # Case 1: default sample_weights=[1], f32 logits (matches the module's default path).
    N, C = 8, 32
    kx, ky, kx2, ky2, ksw = jax.random.split(key, 5)
    x = jax.random.normal(kx, (N, C), dtype=jnp.float32)
    y = jax.random.randint(ky, (N,), 0, C, dtype=jnp.int32)
    label_weights = jnp.linspace(0.5, 1.5, C, dtype=jnp.float32)
    sample_weights = jnp.array([1.0], dtype=jnp.float32)

    out1 = ensemble_loss(x, y, label_weights, sample_weights)
    out1 = jax.block_until_ready(out1)
    ref1 = _reference(x, y, label_weights, sample_weights)
    assert jnp.allclose(out1, ref1, atol=1e-5, rtol=1e-5), (out1, ref1)

    # Case 2: bf16 logits (no wrapper up-cast), ragged batch (exercises padding),
    # per-sample weights (set_sample_weight path).
    N2, C2 = 13, 128
    x2 = jax.random.normal(kx2, (N2, C2), dtype=jnp.bfloat16)
    y2 = jax.random.randint(ky2, (N2,), 0, C2, dtype=jnp.int32)
    lw2 = jnp.linspace(0.25, 2.0, C2, dtype=jnp.float32)
    sw2 = jax.random.uniform(ksw, (N2,), dtype=jnp.float32, minval=0.1, maxval=2.0)

    out2 = ensemble_loss(x2, y2, lw2, sw2)
    out2 = jax.block_until_ready(out2)
    ref2 = _reference(x2, y2, lw2, sw2)
    assert jnp.allclose(out2, ref2, atol=1e-4, rtol=1e-4), (out2, ref2)

    print("KERNEL_OK")
</pallas_src>

<mosaic_0001>
module attributes {stable_mosaic.version = 11 : i64} {
  func.func @_ensemble_loss_kernel(%arg0: i32, %arg1: memref<8x32xf32, #tpu.memory_space<vmem>>, %arg2: memref<8x1xi32, #tpu.memory_space<vmem>>, %arg3: memref<1x32xf32, #tpu.memory_space<vmem>>, %arg4: memref<8x1xf32, #tpu.memory_space<vmem>>, %arg5: memref<1x1xf32, #tpu.memory_space<vmem>>, %arg6: memref<1x1xf32, #tpu.memory_space<vmem>>) attributes {dimension_semantics = [#tpu.dimension_semantics<arbitrary>], iteration_bounds = array<i64: 1>, scalar_prefetch = 0 : i64, scratch_operands = 1 : i64, tpu.core_type = #tpu.core_type<tc>, window_params = [{transform_indices = @transform_0, window_bounds = array<i64: 8, 32>}, {transform_indices = @transform_1, window_bounds = array<i64: 8, 1>}, {pipeline_mode = #tpu.pipeline_mode<synchronous>, transform_indices = @transform_2, window_bounds = array<i64: 1, 32>}, {transform_indices = @transform_3, window_bounds = array<i64: 8, 1>}, {pipeline_mode = #tpu.pipeline_mode<synchronous>, transform_indices = @transform_4, window_bounds = array<i64: 1, 1>}]} {
    %c0_i32 = arith.constant 0 : i32
    %0 = arith.cmpi eq, %arg0, %c0_i32 : i32
    %1 = arith.extui %0 : i1 to i32
    %c0_i32_0 = arith.constant 0 : i32
    %2 = arith.cmpi ne, %1, %c0_i32_0 : i32
    scf.if %2 {
      %cst_16 = arith.constant 0.000000e+00 : f32
      %39 = vector.broadcast %cst_16 : f32 to vector<1x1xf32>
      %c0_17 = arith.constant 0 : index
      %c0_18 = arith.constant 0 : index
      %40 = vector.load %arg6[%c0_17, %c0_18] : memref<1x1xf32, #tpu.memory_space<vmem>>, vector<1x1xf32>
      tpu.vector_store %arg6[%c0_17, %c0_18], %39 {strides = array<i32>} : memref<1x1xf32, #tpu.memory_space<vmem>>, vector<1x1xf32>,
    } else {
    }
    %c0 = arith.constant 0 : index
    %c0_1 = arith.constant 0 : index
    %3 = vector.load %arg1[%c0, %c0_1] : memref<8x32xf32, #tpu.memory_space<vmem>>, vector<8x32xf32>
    %c0_2 = arith.constant 0 : index
    %c0_3 = arith.constant 0 : index
    %4 = vector.load %arg2[%c0_2, %c0_3] : memref<8x1xi32, #tpu.memory_space<vmem>>, vector<8x1xi32>
    %c0_4 = arith.constant 0 : index
    %c0_5 = arith.constant 0 : index
    %5 = vector.load %arg3[%c0_4, %c0_5] : memref<1x32xf32, #tpu.memory_space<vmem>>, vector<1x32xf32>
    %c0_6 = arith.constant 0 : index
    %c0_7 = arith.constant 0 : index
    %6 = vector.load %arg4[%c0_6, %c0_7] : memref<8x1xf32, #tpu.memory_space<vmem>>, vector<8x1xf32>
    %cst = arith.constant dense<0xFF800000> : vector<8xf32>
    %7 = vector.multi_reduction <maximumf>, %3, %cst [1] : vector<8x32xf32> to vector<8xf32>
    %8 = vector.shape_cast %7 : vector<8xf32> to vector<8x1xf32>
    %9 = vector.broadcast %8 : vector<8x1xf32> to vector<8x32xf32>
    %10 = arith.subf %3, %9 : vector<8x32xf32>
    %11 = math.exp %10 : vector<8x32xf32>
    %cst_8 = arith.constant dense<0.000000e+00> : vector<8xf32>
    %12 = vector.multi_reduction <add>, %11, %cst_8 [1] : vector<8x32xf32> to vector<8xf32>
    %13 = vector.shape_cast %12 : vector<8xf32> to vector<8x1xf32>
    %14 = math.log %13 : vector<8x1xf32>
    %15 = arith.addf %8, %14 : vector<8x1xf32>
    %16 = tpu.iota {dimensions = array<i32: 1>} : vector<8x32xi32>
    %17 = vector.broadcast %4 : vector<8x1xi32> to vector<8x32xi32>
    %18 = arith.cmpi eq, %16, %17 : vector<8x32xi32>
    %19 = arith.extui %18 : vector<8x32xi1> to vector<8x32xi32>
    %20 = arith.sitofp %19 : vector<8x32xi32> to vector<8x32xf32>
    %21 = vector.broadcast %6 : vector<8x1xf32> to vector<8x32xf32>
    %22 = vector.broadcast %5 : vector<1x32xf32> to vector<8x32xf32>
    %23 = arith.mulf %21, %22 : vector<8x32xf32>
    %24 = arith.mulf %20, %23 : vector<8x32xf32>
    %25 = vector.broadcast %15 : vector<8x1xf32> to vector<8x32xf32>
    %26 = arith.subf %25, %3 : vector<8x32xf32>
    %27 = arith.mulf %24, %26 : vector<8x32xf32>
    %c0_9 = arith.constant 0 : index
    %c0_10 = arith.constant 0 : index
    %28 = vector.load %arg6[%c0_9, %c0_10] : memref<1x1xf32, #tpu.memory_space<vmem>>, vector<1x1xf32>
    %29 = vector.shape_cast %27 : vector<8x32xf32> to vector<1x8x32xf32>
    %cst_11 = arith.constant dense<0.000000e+00> : vector<1xf32>
    %30 = vector.multi_reduction <add>, %29, %cst_11 [1, 2] : vector<1x8x32xf32> to vector<1xf32>
    %31 = vector.shape_cast %30 : vector<1xf32> to vector<1x1x1xf32>
    %32 = vector.extract %31[0, 0, 0] : f32 from vector<1x1x1xf32>
    %33 = vector.broadcast %32 : f32 to vector<1x1xf32>
    %34 = arith.addf %28, %33 : vector<1x1xf32>
    %c0_12 = arith.constant 0 : index
    %c0_13 = arith.constant 0 : index
    %35 = vector.load %arg6[%c0_12, %c0_13] : memref<1x1xf32, #tpu.memory_space<vmem>>, vector<1x1xf32>
    tpu.vector_store %arg6[%c0_12, %c0_13], %34 {strides = array<i32>} : memref<1x1xf32, #tpu.memory_space<vmem>>, vector<1x1xf32>,
    %c0_i32_14 = arith.constant 0 : i32
    %36 = arith.cmpi eq, %arg0, %c0_i32_14 : i32
    %37 = arith.extui %36 : i1 to i32
    %c0_i32_15 = arith.constant 0 : i32
    %38 = arith.cmpi ne, %37, %c0_i32_15 : i32
    scf.if %38 {
      %c0_16 = arith.constant 0 : index
      %c0_17 = arith.constant 0 : index
      %39 = vector.load %arg6[%c0_16, %c0_17] : memref<1x1xf32, #tpu.memory_space<vmem>>, vector<1x1xf32>
      %cst_18 = arith.constant 8.000000e+00 : f32
      %40 = vector.broadcast %cst_18 : f32 to vector<1x1xf32>
      %41 = arith.divf %39, %40 : vector<1x1xf32>
      %c0_19 = arith.constant 0 : index
      %c0_20 = arith.constant 0 : index
      %42 = vector.load %arg5[%c0_19, %c0_20] : memref<1x1xf32, #tpu.memory_space<vmem>>, vector<1x1xf32>
      tpu.vector_store %arg5[%c0_19, %c0_20], %41 {strides = array<i32>} : memref<1x1xf32, #tpu.memory_space<vmem>>, vector<1x1xf32>,
    } else {
    }
    return
  }
  func.func @transform_0(%arg0: i32) -> (i32, i32) {
    %c0_i32 = arith.constant 0 : i32
    %c0_i32_0 = arith.constant 0 : i32
    return %arg0, %c0_i32 : i32, i32
  }
  func.func @transform_1(%arg0: i32) -> (i32, i32) {
    %c0_i32 = arith.constant 0 : i32
    %c0_i32_0 = arith.constant 0 : i32
    return %arg0, %c0_i32 : i32, i32
  }
  func.func @transform_2(%arg0: i32) -> (i32, i32) {
    %c0_i32 = arith.constant 0 : i32
    %c0_i32_0 = arith.constant 0 : i32
    %c0_i32_1 = arith.constant 0 : i32
    return %c0_i32, %c0_i32_0 : i32, i32
  }
  func.func @transform_3(%arg0: i32) -> (i32, i32) {
    %c0_i32 = arith.constant 0 : i32
    %c0_i32_0 = arith.constant 0 : i32
    return %arg0, %c0_i32 : i32, i32
  }
  func.func @transform_4(%arg0: i32) -> (i32, i32) {
    %c0_i32 = arith.constant 0 : i32
    %c0_i32_0 = arith.constant 0 : i32
    %c0_i32_1 = arith.constant 0 : i32
    return %c0_i32, %c0_i32_0 : i32, i32
  }
}

</mosaic_0001>

<llo_original>
// kernel: tpu_custom_call.1
$region0: #{tpu_custom_call.1}
  #allocation0 [shape = 'u32[]', space=smem, size = 0x4, offset = 0x4, fixed_abs, tag = 'smem constant byte address 0x4 - core index']
  #allocation1 [shape = 'u32[72,128]{1,0:T(1,128)}', space=vmem, size = 0x9000, scoped, tag = 'internal scratch']
  #allocation2 [shape = 'f32[1,1]{1,0:T(1,128)}', space=vmem, size = 0x200, scoped, tag = 'scratch operand']
  %s0 = inlined_call_operand.vmem [shape: f32[8,32], index: 0, kind: input, shape index: {}]
  %s1 = inlined_call_operand.vmem [shape: s32[8,1], index: 1, kind: input, shape index: {}]
  %s2 = inlined_call_operand.vmem [shape: f32[1,32], index: 2, kind: input, shape index: {}]
  %s3 = inlined_call_operand.vmem [shape: f32[8,1], index: 3, kind: input, shape index: {}]
  %s4 = inlined_call_operand.hbm [shape: f32[1,1], index: 4, kind: output, shape index: {}]
  %s5 = sld [smem:[#allocation0]]
  $region34: #{tpu_custom_call.1} parent=0
    _
  %s7 = ssub.s32 1, %s5
  %s8 = scalar_select 0, %s7, %s5
  $region1: #{tpu_custom_call.1} parent=0
    #allocation3 [shape = 'u8[512]{0}', space=vmem, size = 0x400, scoped, tag = 'output window, operand 0, single buffered']
    #allocation4 [shape = 's32[1]{0}', space=sflag, size = 0x4, scoped, tag = 'scoped memory for tpu_custom_call.1']
    %9 = vsyncpa [#allocation4], 0
    // Predicated region
    $region2: #{tpu_custom_call.1} parent=1 // pred_check
      _
    $region3: #{tpu_custom_call.1} parent=1 // pred_check_branch
      %11 = sbr.rel (0) target = $region5
    $region4: #{tpu_custom_call.1} parent=1 // pred_region
      _
    $region5: #{tpu_custom_call.1} parent=1 // pred_fallthru
      _
    // Predicated region
    $region6: #{tpu_custom_call.1} parent=1 // pred_check
      _
    $region7: #{tpu_custom_call.1} parent=1 // pred_check_branch
      %13 = sbr.rel (0) target = $region9
    $region8: #{tpu_custom_call.1} parent=1 // pred_region
      _
    $region9: #{tpu_custom_call.1} parent=1 // pred_fallthru
      _
    // Predicated region
    $region10: #{tpu_custom_call.1} parent=1 // pred_check
      _
    $region11: #{tpu_custom_call.1} parent=1 // pred_check_branch
      %15 = sbr.rel (0) target = $region13
    $region12: #{tpu_custom_call.1} parent=1 // pred_region
      _
    $region13: #{tpu_custom_call.1} parent=1 // pred_fallthru
      _
    // Predicated region
    $region14: #{tpu_custom_call.1} parent=1 // pred_check
      _
    $region15: #{tpu_custom_call.1} parent=1 // pred_check_branch
      %17 = sbr.rel (0) target = $region17
    $region16: #{tpu_custom_call.1} parent=1 // pred_region
      _
    $region17: #{tpu_custom_call.1} parent=1 // pred_fallthru
      _
    %p18 = scmp.eq.s32.totalorder 0, 0
    // Predicated region
    $region18: #{tpu_custom_call.1} parent=1 // pred_check
      %p19 = pneg %p18
    $region19: #{tpu_custom_call.1} parent=1 // pred_check_branch
      %21 = sbr.rel (%p19) target = $region21
    $region20: #{tpu_custom_call.1} parent=1 // pred_region
      %vm22 = vcmask 0
      %23 = vst.msk [vmem:[#allocation2] sm:$0x1] %vm22, 0.0
    $region21: #{tpu_custom_call.1} parent=1 // pred_fallthru
      _
    %v24 = vld [vmem:[%s0] sm:$0xff]
    %v25 = vld [vmem:[%s1] sm:$0xff]
    %v26 = vld [vmem:[%s2] sm:$0x1]
    %v27 = vld [vmem:[%s3] sm:$0xff]
    %vm28 = vcmask 261120
    %v29 = vsel %vm28, %v24, -inf
    %30 = vmax.xlane.f32.xlu0 %v29
    %v31 = vpop.xlane.xlu0 %30
    %v32 = vsub.f32 %v24, %v31
    %v33 = vmul.f32 %v32, 1.442695
    %v34 = vpow.pop %v33
    %v35 = vsel %vm28, %v34, 0.0
    %36 = vadd.xlane.f32.xlu0 %v35
    %v37 = vpop.xlane.xlu0 %36
    %v38 = vlog2.pop %v37
    %v39 = vmul.f32 %v38, 0.6931472
    %v40 = vadd.f32 %v31, %v39
    %v41 = vlaneseq
    %v42 = vand.u32 %v41, 127
    %43 = vset.pattern.permute.xlu0 0
    %44 = vperm.xlu0 %43, %v25
    %v45 = vpop.permute.xlu0 %44
    %vm46 = vcmp.eq.s32.totalorder %v42, %v45
    %v47 = vsel %vm46, 1, 0
    %v48 = vcvt.s32.f32 %v47
    %50 = vset.pattern.permute.xlu0 0
    %51 = vperm.xlu0 %50, %v27
    %v52 = vpop.permute.xlu0 %51
    %v55 = vperm.slane %v26, 0
    %v57 = vmul.f32 %v52, %v55
    %v58 = vmul.f32 %v48, %v57
    %v59 = vsub.f32 %v40, %v24
    %v60 = vmul.f32 %v58, %v59
    %v61 = vld [vmem:[#allocation2] sm:$0x1]
    %v62 = vsel %vm28, %v60, 0.0
    %63 = vadd.xlane.f32.xlu0 %v62
    %v64 = vpop.xlane.xlu0 %63
    %v65 = vrot.slane %v64, 4
    %v66 = vadd.f32 %v64, %v65
    %v67 = vrot.slane %v66, 2
    %v68 = vadd.f32 %v66, %v67
    %v69 = vrot.slane %v68, 1
    %v70 = vadd.f32 %v68, %v69
    %s71 = vtos %v70
    %v72 = vstv %s71
    %v73 = vadd.f32 %v61, %v72
    %vm74 = vcmask 0
    %75 = vst.msk [vmem:[#allocation2] sm:$0x1] %vm74, %v73
    // Predicated region
    $region22: #{tpu_custom_call.1} parent=1 // pred_check
      %p76 = pneg %p18
    $region23: #{tpu_custom_call.1} parent=1 // pred_check_branch
      %78 = sbr.rel (%p76) target = $region25
    $region24: #{tpu_custom_call.1} parent=1 // pred_region
      %v79 = vld [vmem:[#allocation2] sm:$0x1]
      %v80 = vrcp.pop 8.0
      %v81 = vmul.f32 8.0, %v80
      %v82 = vsub.f32 1.0, %v81
      %v83 = vmul.f32 %v80, %v82
      %v84 = vadd.f32 %v80, %v83
      %vm85 = vweird.f32 %v80
      %v86 = vsel %vm85, %v80, %v84
      %v87 = vmul.f32 %v79, %v86
      %88 = vst.msk [vmem:[#allocation3] sm:$0x1] %vm74, %v87
    $region25: #{tpu_custom_call.1} parent=1 // pred_fallthru
      _
    // Predicated region
    $region26: #{tpu_custom_call.1} parent=1 // pred_check
      _
    $region27: #{tpu_custom_call.1} parent=1 // pred_check_branch
      %90 = sbr.rel (0) target = $region29
    $region28: #{tpu_custom_call.1} parent=1 // pred_region
      %92 = vsyncadd [#allocation4], 0
      %s94 = sshll.u32 [#allocation3], 4
      %s95 = int_to_ptr.vmem [resolvable:$true] %s94
      %s96 = sshll.u32 %s4, 4
      %s97 = int_to_ptr.hbm [resolvable:$true] %s96
      %99 = dma.vmem_to_hbm [thread:$0]  %s95, 16, %s97, [#allocation4]
    $region29: #{tpu_custom_call.1} parent=1 // pred_fallthru
      _
    // Predicated region
    $region30: #{tpu_custom_call.1} parent=1 // pred_check
      _
    $region31: #{tpu_custom_call.1} parent=1 // pred_check_branch
      %101 = sbr.rel (0) target = $region33
    $region32: #{tpu_custom_call.1} parent=1 // pred_region
      %103 = dma.done [#allocation4], 16
    $region33: #{tpu_custom_call.1} parent=1 // pred_fallthru
      _
    %104 = vsyncpa [#allocation4], 1

</llo_original>
